<compile_context>
chip_gen: v7x
topology: tpu7x:2x2x1
jax: 0.10.0
libtpu: 0.0.40
codegen_flags: <defaults>
</compile_context>

<pallas_src>
import functools
import math
from typing import NamedTuple

import jax
import jax.numpy as jnp
from jax.experimental import pallas as pl
from jax.experimental.pallas import tpu as pltpu


# ----------------------------------------------------------------------------
# small helpers
# ----------------------------------------------------------------------------
def _round_up(x, m):
    return (x + m - 1) // m * m


def _cdiv(a, b):
    return (a + b - 1) // b


def _vmem_capacity_bytes():
    """Per-TensorCore VMEM capacity (v5e/v6e: 128 MiB, v7x: 64 MiB)."""
    try:
        return int(pltpu.get_tpu_info().vmem_capacity_bytes)
    except Exception:
        return 64 << 20  # conservative fallback (v7x per-TC)


def _default_act_dtype():
    """bf16 bias-add/ReLU on chips with a bf16 VPU path (v6e/v7x), else f32."""
    try:
        kind = jax.devices()[0].device_kind.lower()
    except Exception:
        kind = ""
    if ("v6" in kind) or ("v7" in kind):
        return jnp.bfloat16
    return jnp.float32


# ----------------------------------------------------------------------------
# kernels
# ----------------------------------------------------------------------------
def _ffn_kernel_resident(x_ref, w1_ref, b1_ref, w2_ref, b2_ref, o_ref):
    # x_ref: (tm, Hp) x-dtype   w1_ref: (Hp, PFp) bf16   b1_ref: (1, PFp) act
    # w2_ref: (PFp, Hp) bf16    b2_ref: (1, Hp) f32      o_ref: (tm, Hp)
    x = x_ref[...].astype(w1_ref.dtype)                       # in-kernel bf16 cast
    h = jnp.dot(x, w1_ref[...], preferred_element_type=jnp.float32)
    h = jnp.maximum(h.astype(b1_ref.dtype) + b1_ref[...], 0)  # bias + ReLU
    # Dropout: module evaluated in inference mode -> identity.
    # TODO(synk): training-mode dropout would need a PRNG seed input
    # (pltpu.prng_seed + pltpu.prng_random_bits) and inverted-dropout scaling.
    acc = jnp.dot(h.astype(w2_ref.dtype), w2_ref[...],
                  preferred_element_type=jnp.float32)
    o_ref[...] = (acc + b2_ref[...]).astype(o_ref.dtype)


def _ffn_kernel_streamed(x_ref, w1_ref, b1_ref, w2_ref, b2_ref, o_ref, acc_ref):
    # Same as above but with the PF dimension tiled on grid axis 1 and an f32
    # VMEM accumulator for the second matmul's partial products.
    k = pl.program_id(1)

    @pl.when(k == 0)
    def _():
        acc_ref[...] = jnp.zeros_like(acc_ref)

    x = x_ref[...].astype(w1_ref.dtype)
    h = jnp.dot(x, w1_ref[...], preferred_element_type=jnp.float32)
    h = jnp.maximum(h.astype(b1_ref.dtype) + b1_ref[...], 0)
    # Dropout: identity (inference mode) -- see TODO in the resident kernel.
    acc_ref[...] += jnp.dot(h.astype(w2_ref.dtype), w2_ref[...],
                            preferred_element_type=jnp.float32)

    @pl.when(k == pl.num_programs(1) - 1)
    def _():
        o_ref[...] = (acc_ref[...] + b2_ref[...]).astype(o_ref.dtype)


# ----------------------------------------------------------------------------
# tiling / VMEM configuration
# ----------------------------------------------------------------------------
class _Config(NamedTuple):
    tm: int        # row tile
    nm: int        # number of row tiles
    tpf: int       # PF tile
    nk: int        # number of PF tiles (1 => weights-resident path)
    H_pad: int
    PF_pad: int
    vmem_limit: int


def _select_config(M, H_pad, PF128, x_bytes, out_bytes, act_bytes,
                   tile_budget_cap, vmem_hw):
    """Pick (tm, tpf, nk) per generation.  Prefers the weights-resident path
    (nk == 1), then the largest row tile that fits the VMEM budget."""
    budget = tile_budget_cap * 85 // 100 - (2 << 20)   # compiler-scratch headroom
    budget = max(budget, 1 << 20)

    def est(tm, tpf, streamed):
        v = 2 * tm * H_pad * x_bytes          # x tile (original dtype, 2 bufs)
        v += 2 * tm * H_pad * out_bytes       # out tile (2 bufs)
        v += 2 * H_pad * tpf * 2              # w1 block (bf16, 2 bufs)
        v += 2 * tpf * H_pad * 2              # w2 block (bf16, 2 bufs)
        v += 2 * tpf * act_bytes + 2 * H_pad * 4   # biases (2 bufs)
        v += tm * tpf * 8                     # h intermediate (f32 + casts)
        v += tm * H_pad * 2                   # in-kernel bf16 copy of x
        if streamed:
            v += tm * H_pad * 4               # f32 accumulator scratch
        return v

    tm_cands = (1024, 768, 512, 384, 256, 128, 64, 32, 16, 8)
    max_nk = max(1, PF128 // 128)
    M8 = _round_up(M, 8)

    def row_tile(tm_target):
        tm0 = min(tm_target, M8)
        nm = _cdiv(M, tm0)
        # v7x megacore: give both TensorCores a row tile when there is enough work.
        if nm == 1 and M >= 1024:
            nm = 2
        tm0 = _round_up(_cdiv(M, nm), 8)
        return tm0, nm

    chosen = None
    for min_tm in (256, 8):                    # first pass keeps MXU-friendly tiles
        for nk in range(1, max_nk + 1):
            tpf = _round_up(_cdiv(PF128, nk), 128)
            for tm_target in tm_cands:
                if tm_target < min_tm:
                    continue
                tm, nm = row_tile(tm_target)
                if est(tm, tpf, streamed=(nk > 1)) <= budget:
                    chosen = (tm, nm, tpf, nk)
                    break
            if chosen is not None:
                break
        if chosen is not None:
            break
    if chosen is None:                         # extreme shapes: smallest config
        tm, nm = row_tile(8)
        nk = max_nk
        tpf = _round_up(_cdiv(PF128, nk), 128)
        chosen = (tm, nm, tpf, nk)

    tm, nm, tpf, nk = chosen
    PF_pad = nk * tpf
    vmem_limit = int(min(max(est(tm, tpf, nk > 1) * 3 // 2, 16 << 20),
                         max(vmem_hw - (2 << 20), 16 << 20)))
    return _Config(tm=tm, nm=nm, tpf=tpf, nk=nk, H_pad=H_pad, PF_pad=PF_pad,
                   vmem_limit=vmem_limit)


# ----------------------------------------------------------------------------
# parameter preparation (hoist out of the per-call serving path)
# ----------------------------------------------------------------------------
def prepare_params(w1, b1, w2, b2, act_dtype=None):
    """Pad weights/biases to 128-multiples and cast the MXU operands to bf16.
    Do this ONCE (outside the hot path); the kernel consumes these directly."""
    if act_dtype is None:
        act_dtype = _default_act_dtype()
    H, PF = w1.shape
    H_pad = _round_up(H, 128)
    PF128 = _round_up(PF, 128)
    w1p = jnp.pad(w1, ((0, H_pad - H), (0, PF128 - PF))).astype(jnp.bfloat16)
    w2p = jnp.pad(w2, ((0, PF128 - PF), (0, H_pad - H))).astype(jnp.bfloat16)
    b1p = jnp.pad(b1, (0, PF128 - PF)).astype(act_dtype).reshape(1, PF128)
    b2p = jnp.pad(b2, (0, H_pad - H)).astype(jnp.float32).reshape(1, H_pad)
    return w1p, b1p, w2p, b2p


# ----------------------------------------------------------------------------
# pallas_call wrapper
# ----------------------------------------------------------------------------
@functools.partial(jax.jit, static_argnames=("cfg",))
def _ffn_apply(x, w1p, b1p, w2p, b2p, *, cfg):
    orig_shape = x.shape
    H = orig_shape[-1]
    M = math.prod(orig_shape[:-1])
    tm, nm, tpf, nk = cfg.tm, cfg.nm, cfg.tpf, cfg.nk
    H_pad, PF_pad = cfg.H_pad, cfg.PF_pad
    M_pad = nm * tm

    # x stays in its original dtype (bf16 cast happens in-kernel); pad only if
    # the tiling requires it.
    x2d = x.reshape(M, H)
    if (M_pad, H_pad) != (M, H):
        x2d = jnp.pad(x2d, ((0, M_pad - M), (0, H_pad - H)))

    # Weights arrive already padded to 128-multiples; top up only when the PF
    # tile overshoots (awkward PF values).
    PF128 = w1p.shape[1]
    if PF_pad != PF128:
        w1p = jnp.pad(w1p, ((0, 0), (0, PF_pad - PF128)))
        w2p = jnp.pad(w2p, ((0, PF_pad - PF128), (0, 0)))
        b1p = jnp.pad(b1p, ((0, 0), (0, PF_pad - PF128)))

    out_dtype = x.dtype
    x_bytes = jnp.dtype(x.dtype).itemsize
    out_bytes = jnp.dtype(out_dtype).itemsize
    weight_reads = 1 if nk == 1 else nm          # streamed weights re-fetched per M tile
    cost = pl.CostEstimate(
        flops=4 * M_pad * H_pad * PF_pad,        # two matmuls, 2*M*H*PF each
        transcendentals=0,
        bytes_accessed=(M_pad * H_pad * x_bytes
                        + weight_reads * (w1p.size + w2p.size) * 2
                        + b1p.size * jnp.dtype(b1p.dtype).itemsize + b2p.size * 4
                        + M_pad * H_pad * out_bytes),
    )

    if nk == 1:
        # Weights-resident fast path: no PF grid axis, no accumulator scratch.
        grid = (nm,)
        in_specs = [
            pl.BlockSpec((tm, H_pad), lambda i: (i, 0)),        # x tile
            pl.BlockSpec((H_pad, PF_pad), lambda i: (0, 0)),    # w1 (resident)
            pl.BlockSpec((1, PF_pad), lambda i: (0, 0)),        # b1
            pl.BlockSpec((PF_pad, H_pad), lambda i: (0, 0)),    # w2 (resident)
            pl.BlockSpec((1, H_pad), lambda i: (0, 0)),         # b2
        ]
        out_specs = pl.BlockSpec((tm, H_pad), lambda i: (i, 0))
        scratch = []
        kernel = _ffn_kernel_resident
        dims = ("parallel",)
    else:
        # Streamed path: PF reduction axis last, f32 VMEM accumulator.
        # (If profiling shows exposed DMA at k boundaries, w1/w2 specs could
        #  take pipeline_mode=pl.Buffered(3) at the cost of extra VMEM.)
        grid = (nm, nk)
        in_specs = [
            pl.BlockSpec((tm, H_pad), lambda i, k: (i, 0)),     # x tile
            pl.BlockSpec((H_pad, tpf), lambda i, k: (0, k)),    # w1 stream
            pl.BlockSpec((1, tpf), lambda i, k: (0, k)),        # b1 slice
            pl.BlockSpec((tpf, H_pad), lambda i, k: (k, 0)),    # w2 stream
            pl.BlockSpec((1, H_pad), lambda i, k: (0, 0)),      # b2
        ]
        out_specs = pl.BlockSpec((tm, H_pad), lambda i, k: (i, 0))
        scratch = [pltpu.VMEM((tm, H_pad), jnp.float32)]
        kernel = _ffn_kernel_streamed
        dims = ("parallel", "arbitrary")

    out_p = pl.pallas_call(
        kernel,
        out_shape=jax.ShapeDtypeStruct((M_pad, H_pad), out_dtype),
        grid_spec=pltpu.PrefetchScalarGridSpec(
            num_scalar_prefetch=0,
            grid=grid,
            in_specs=in_specs,
            out_specs=out_specs,
            scratch_shapes=scratch),
        compiler_params=pltpu.CompilerParams(
            dimension_semantics=dims,
            vmem_limit_bytes=cfg.vmem_limit),
        cost_estimate=cost,
    )(x2d, w1p, b1p, w2p, b2p)

    return out_p[:M, :H].reshape(orig_shape)


def positionwise_ffn(x, w1p, b1p, w2p, b2p, *, vmem_cap_bytes=None):
    """x: [..., H]; params already prepared by prepare_params() (padded, bf16).

    `vmem_cap_bytes` overrides the VMEM budget used for tile selection (for
    testing the streamed/accumulator path); the actual vmem_limit_bytes handed
    to the compiler is always bounded by the real hardware capacity.
    """
    H = x.shape[-1]
    M = math.prod(x.shape[:-1])
    H_pad, PF128 = w1p.shape
    vmem_hw = _vmem_capacity_bytes()
    cap = vmem_cap_bytes if vmem_cap_bytes is not None else vmem_hw
    cfg = _select_config(
        M, H_pad, PF128,
        x_bytes=jnp.dtype(x.dtype).itemsize,
        out_bytes=jnp.dtype(x.dtype).itemsize,
        act_bytes=jnp.dtype(b1p.dtype).itemsize,
        tile_budget_cap=cap,
        vmem_hw=vmem_hw)
    return _ffn_apply(x, w1p, b1p, w2p, b2p, cfg=cfg)


# ----------------------------------------------------------------------------
# init + reference
# ----------------------------------------------------------------------------
def init_params(key, hid_dim, pf_dim, dtype=jnp.float32):
    """Deterministic init mimicking nn.Linear's uniform(-1/sqrt(fan_in), ...)."""
    k1, k2, k3, k4 = jax.random.split(key, 4)
    bound1 = 1.0 / jnp.sqrt(hid_dim)
    bound2 = 1.0 / jnp.sqrt(pf_dim)
    # Stored already transposed to (in, out) for the kernel.
    w1 = jax.random.uniform(k1, (hid_dim, pf_dim), dtype, -bound1, bound1)
    b1 = jax.random.uniform(k2, (pf_dim,), dtype, -bound1, bound1)
    w2 = jax.random.uniform(k3, (pf_dim, hid_dim), dtype, -bound2, bound2)
    b2 = jax.random.uniform(k4, (hid_dim,), dtype, -bound2, bound2)
    return w1, b1, w2, b2


def _ref_ffn(x, w1, b1, w2, b2):
    # Eval-mode reference (dropout == identity), f32 math.
    return jnp.maximum(x @ w1 + b1, 0.0) @ w2 + b2


# ----------------------------------------------------------------------------
# main
# ----------------------------------------------------------------------------
if __name__ == "__main__":
    key = jax.random.PRNGKey(0)
    kx, kp = jax.random.split(key)

    # 1) Small shapes consistent with the module (weights-resident path).
    batch, seq, hid_dim, pf_dim = 2, 8, 32, 64
    x = jax.random.normal(kx, (batch, seq, hid_dim), jnp.float32)
    w1, b1, w2, b2 = init_params(kp, hid_dim, pf_dim)
    params = prepare_params(w1, b1, w2, b2)        # pad + bf16 cast, done once

    out = positionwise_ffn(x, *params)
    jax.block_until_ready(out)
    ref = _ref_ffn(x, w1, b1, w2, b2)
    assert out.shape == (batch, seq, hid_dim)
    # bf16 MXU operands vs f32 reference -> loose tolerance.
    assert jnp.allclose(out, ref, atol=2e-2, rtol=2e-2), \
        float(jnp.max(jnp.abs(out - ref)))

    # 2) Larger shape: exercises the multi-row-tile weights-resident grid.
    kx2, kp2 = jax.random.split(jax.random.PRNGKey(1))
    B2, S2, H2, PF2 = 2, 1024, 256, 1024
    x2 = jax.random.normal(kx2, (B2, S2, H2), jnp.float32)
    p2 = init_params(kp2, H2, PF2)
    p2_prep = prepare_params(*p2)
    out2 = positionwise_ffn(x2, *p2_prep)
    jax.block_until_ready(out2)
    ref2 = _ref_ffn(x2, *p2)
    assert jnp.allclose(out2, ref2, atol=2e-2, rtol=2e-2), \
        float(jnp.max(jnp.abs(out2 - ref2)))

    # 3) Force the streamed (PF-tiled + accumulator) path with a small VMEM
    #    budget to verify the k-loop / pl.when accumulator kernel as well.
    kx3, kp3 = jax.random.split(jax.random.PRNGKey(2))
    B3, S3, H3, PF3 = 4, 128, 256, 1024
    x3 = jax.random.normal(kx3, (B3, S3, H3), jnp.float32)
    p3 = init_params(kp3, H3, PF3)
    p3_prep = prepare_params(*p3)
    out3 = positionwise_ffn(x3, *p3_prep, vmem_cap_bytes=6 << 20)
    jax.block_until_ready(out3)
    ref3 = _ref_ffn(x3, *p3)
    assert jnp.allclose(out3, ref3, atol=2e-2, rtol=2e-2), \
        float(jnp.max(jnp.abs(out3 - ref3)))

    print("KERNEL_OK")
</pallas_src>

<mosaic_0001>
module attributes {stable_mosaic.version = 11 : i64} {
  func.func @_ffn_kernel_resident(%arg0: i32, %arg1: memref<16x128xf32, #tpu.memory_space<vmem>>, %arg2: memref<128x128xbf16, #tpu.memory_space<vmem>>, %arg3: memref<1x128xf32, #tpu.memory_space<vmem>>, %arg4: memref<128x128xbf16, #tpu.memory_space<vmem>>, %arg5: memref<1x128xf32, #tpu.memory_space<vmem>>, %arg6: memref<16x128xf32, #tpu.memory_space<vmem>>) attributes {dimension_semantics = [#tpu.dimension_semantics<parallel>], iteration_bounds = array<i64: 1>, scalar_prefetch = 0 : i64, scratch_operands = 0 : i64, tpu.core_type = #tpu.core_type<tc>, window_params = [{transform_indices = @transform_0, window_bounds = array<i64: 16, 128>}, {pipeline_mode = #tpu.pipeline_mode<synchronous>, transform_indices = @transform_1, window_bounds = array<i64: 128, 128>}, {pipeline_mode = #tpu.pipeline_mode<synchronous>, transform_indices = @transform_2, window_bounds = array<i64: 1, 128>}, {pipeline_mode = #tpu.pipeline_mode<synchronous>, transform_indices = @transform_3, window_bounds = array<i64: 128, 128>}, {pipeline_mode = #tpu.pipeline_mode<synchronous>, transform_indices = @transform_4, window_bounds = array<i64: 1, 128>}, {transform_indices = @transform_5, window_bounds = array<i64: 16, 128>}]} {
    %c0 = arith.constant 0 : index
    %c0_0 = arith.constant 0 : index
    %0 = vector.load %arg1[%c0, %c0_0] : memref<16x128xf32, #tpu.memory_space<vmem>>, vector<16x128xf32>
    %1 = arith.truncf %0 : vector<16x128xf32> to vector<16x128xbf16>
    %c0_1 = arith.constant 0 : index
    %c0_2 = arith.constant 0 : index
    %2 = vector.load %arg2[%c0_1, %c0_2] : memref<128x128xbf16, #tpu.memory_space<vmem>>, vector<128x128xbf16>
    %cst = arith.constant dense<0.000000e+00> : vector<16x128xf32>
    %3 = tpu.matmul %1, %2, %cst {dimension_numbers = #tpu.dot_dimension_numbers<[1], [0], [0], [1], [0, 0, 1, 1], [], []>} : vector<16x128xbf16>, vector<128x128xbf16>, vector<16x128xf32> -> vector<16x128xf32>
    %c0_3 = arith.constant 0 : index
    %c0_4 = arith.constant 0 : index
    %4 = vector.load %arg3[%c0_3, %c0_4] : memref<1x128xf32, #tpu.memory_space<vmem>>, vector<1x128xf32>
    %5 = vector.broadcast %4 : vector<1x128xf32> to vector<16x128xf32>
    %6 = arith.addf %3, %5 : vector<16x128xf32>
    %cst_5 = arith.constant 0.000000e+00 : f32
    %7 = vector.broadcast %cst_5 : f32 to vector<16x128xf32>
    %8 = arith.maximumf %6, %7 : vector<16x128xf32>
    %9 = arith.truncf %8 : vector<16x128xf32> to vector<16x128xbf16>
    %c0_6 = arith.constant 0 : index
    %c0_7 = arith.constant 0 : index
    %10 = vector.load %arg4[%c0_6, %c0_7] : memref<128x128xbf16, #tpu.memory_space<vmem>>, vector<128x128xbf16>
    %cst_8 = arith.constant dense<0.000000e+00> : vector<16x128xf32>
    %11 = tpu.matmul %9, %10, %cst_8 {dimension_numbers = #tpu.dot_dimension_numbers<[1], [0], [0], [1], [0, 0, 1, 1], [], []>} : vector<16x128xbf16>, vector<128x128xbf16>, vector<16x128xf32> -> vector<16x128xf32>
    %c0_9 = arith.constant 0 : index
    %c0_10 = arith.constant 0 : index
    %12 = vector.load %arg5[%c0_9, %c0_10] : memref<1x128xf32, #tpu.memory_space<vmem>>, vector<1x128xf32>
    %13 = vector.broadcast %12 : vector<1x128xf32> to vector<16x128xf32>
    %14 = arith.addf %11, %13 : vector<16x128xf32>
    %c0_11 = arith.constant 0 : index
    %c0_12 = arith.constant 0 : index
    %15 = vector.load %arg6[%c0_11, %c0_12] : memref<16x128xf32, #tpu.memory_space<vmem>>, vector<16x128xf32>
    tpu.vector_store %arg6[%c0_11, %c0_12], %14 {strides = array<i32>} : memref<16x128xf32, #tpu.memory_space<vmem>>, vector<16x128xf32>,
    return
  }
  func.func @transform_0(%arg0: i32) -> (i32, i32) {
    %c0_i32 = arith.constant 0 : i32
    %c0_i32_0 = arith.constant 0 : i32
    return %arg0, %c0_i32 : i32, i32
  }
  func.func @transform_1(%arg0: i32) -> (i32, i32) {
    %c0_i32 = arith.constant 0 : i32
    %c0_i32_0 = arith.constant 0 : i32
    %c0_i32_1 = arith.constant 0 : i32
    return %c0_i32, %c0_i32_0 : i32, i32
  }
  func.func @transform_2(%arg0: i32) -> (i32, i32) {
    %c0_i32 = arith.constant 0 : i32
    %c0_i32_0 = arith.constant 0 : i32
    %c0_i32_1 = arith.constant 0 : i32
    return %c0_i32, %c0_i32_0 : i32, i32
  }
  func.func @transform_3(%arg0: i32) -> (i32, i32) {
    %c0_i32 = arith.constant 0 : i32
    %c0_i32_0 = arith.constant 0 : i32
    %c0_i32_1 = arith.constant 0 : i32
    return %c0_i32, %c0_i32_0 : i32, i32
  }
  func.func @transform_4(%arg0: i32) -> (i32, i32) {
    %c0_i32 = arith.constant 0 : i32
    %c0_i32_0 = arith.constant 0 : i32
    %c0_i32_1 = arith.constant 0 : i32
    return %c0_i32, %c0_i32_0 : i32, i32
  }
  func.func @transform_5(%arg0: i32) -> (i32, i32) {
    %c0_i32 = arith.constant 0 : i32
    %c0_i32_0 = arith.constant 0 : i32
    return %arg0, %c0_i32 : i32, i32
  }
}

</mosaic_0001>

<llo_original>
// kernel: _ffn_apply.1
$region0: #{_ffn_apply.1}
  #allocation0 [shape = 'u32[]', space=smem, size = 0x4, offset = 0x4, fixed_abs, tag = 'smem constant byte address 0x4 - core index']
  #allocation1 [shape = 'u32[144,128]{1,0:T(1,128)}', space=vmem, size = 0x12000, scoped, tag = 'internal scratch']
  %s0 = inlined_call_operand.vmem [shape: f32[16,128], index: 0, kind: input, shape index: {}]
  %s1 = inlined_call_operand.hbm [shape: bf16[128,128], index: 1, kind: input, shape index: {}]
  %s2 = inlined_call_operand.vmem [shape: f32[1,128], index: 2, kind: input, shape index: {}]
  %s3 = inlined_call_operand.hbm [shape: bf16[128,128], index: 3, kind: input, shape index: {}]
  %s4 = inlined_call_operand.vmem [shape: f32[1,128], index: 4, kind: input, shape index: {}]
  %s5 = inlined_call_operand.vmem [shape: f32[16,128], index: 5, kind: output, shape index: {}]
  %s6 = sld [smem:[#allocation0]]
  $region38: #{_ffn_apply.1} parent=0
    _
  %s8 = ssub.s32 1, %s6
  %s9 = scalar_select 0, %s8, %s6
  $region1: #{_ffn_apply.1} parent=0
    #allocation2 [shape = 'u8[32768]{0}', space=vmem, size = 0x8000, scoped, tag = 'input window, operand 1, single buffered']
    #allocation3 [shape = 's32[1]{0}', space=sflag, size = 0x4, scoped, tag = 'scoped memory for _ffn_apply.1']
    #allocation4 [shape = 'u8[32768]{0}', space=vmem, size = 0x8000, scoped, tag = 'input window, operand 3, single buffered']
    #allocation5 [shape = 's32[1]{0}', space=sflag, size = 0x4, scoped, tag = 'scoped memory for _ffn_apply.1']
    %10 = vsyncpa [#allocation3], 0
    %11 = vsyncpa [#allocation5], 0
    // Predicated region
    $region2: #{_ffn_apply.1} parent=1 // pred_check
      _
    $region3: #{_ffn_apply.1} parent=1 // pred_check_branch
      %13 = sbr.rel (0) target = $region5
    $region4: #{_ffn_apply.1} parent=1 // pred_region
      _
    $region5: #{_ffn_apply.1} parent=1 // pred_fallthru
      _
    // Predicated region
    $region6: #{_ffn_apply.1} parent=1 // pred_check
      _
    $region7: #{_ffn_apply.1} parent=1 // pred_check_branch
      %15 = sbr.rel (0) target = $region9
    $region8: #{_ffn_apply.1} parent=1 // pred_region
      %s17 = ssub.s32 1024, 1024
      %18 = vsyncadd [#allocation3], %s17
      %s19 = sshll.u32 [#allocation2], 4
      %s20 = int_to_ptr.vmem [resolvable:$true] %s19
      %25 = dma.hbm_to_vmem [thread:$0]  %s1, 1024, %s20, [#allocation3], 64, 64, 4
    $region9: #{_ffn_apply.1} parent=1 // pred_fallthru
      _
    // Predicated region
    $region10: #{_ffn_apply.1} parent=1 // pred_check
      _
    $region11: #{_ffn_apply.1} parent=1 // pred_check_branch
      %27 = sbr.rel (0) target = $region13
    $region12: #{_ffn_apply.1} parent=1 // pred_region
      _
    $region13: #{_ffn_apply.1} parent=1 // pred_fallthru
      _
    // Predicated region
    $region14: #{_ffn_apply.1} parent=1 // pred_check
      _
    $region15: #{_ffn_apply.1} parent=1 // pred_check_branch
      %29 = sbr.rel (0) target = $region17
    $region16: #{_ffn_apply.1} parent=1 // pred_region
      %s31 = ssub.s32 1024, 1024
      %32 = vsyncadd [#allocation5], %s31
      %s33 = sshll.u32 [#allocation4], 4
      %s34 = int_to_ptr.vmem [resolvable:$true] %s33
      %39 = dma.hbm_to_vmem [thread:$0]  %s3, 1024, %s34, [#allocation5], 64, 64, 4
    $region17: #{_ffn_apply.1} parent=1 // pred_fallthru
      _
    // Predicated region
    $region18: #{_ffn_apply.1} parent=1 // pred_check
      _
    $region19: #{_ffn_apply.1} parent=1 // pred_check_branch
      %41 = sbr.rel (0) target = $region21
    $region20: #{_ffn_apply.1} parent=1 // pred_region
      _
    $region21: #{_ffn_apply.1} parent=1 // pred_fallthru
      _
    // Predicated region
    $region22: #{_ffn_apply.1} parent=1 // pred_check
      _
    $region23: #{_ffn_apply.1} parent=1 // pred_check_branch
      %43 = sbr.rel (0) target = $region25
    $region24: #{_ffn_apply.1} parent=1 // pred_region
      %44 = dma.done [#allocation3], 1024
    $region25: #{_ffn_apply.1} parent=1 // pred_fallthru
      _
    // Predicated region
    $region26: #{_ffn_apply.1} parent=1 // pred_check
      _
    $region27: #{_ffn_apply.1} parent=1 // pred_check_branch
      %46 = sbr.rel (0) target = $region29
    $region28: #{_ffn_apply.1} parent=1 // pred_region
      %47 = dma.done [#allocation5], 1024
    $region29: #{_ffn_apply.1} parent=1 // pred_fallthru
      _
    %v49 = vld [vmem:[%s0] sm:$0xff]
    %v50 = vld [vmem:[%s0 + $0x8] sm:$0xff]
    %v51 = vpack.c.bf16 %v50, %v49
    %v52 = vld [vmem:[#allocation2] sm:$0xf]
    %v53 = vld [vmem:[#allocation2 + $0x4] sm:$0xf]
    %v54 = vld [vmem:[#allocation2 + $0x8] sm:$0xf]
    %v55 = vld [vmem:[#allocation2 + $0xc] sm:$0xf]
    %v56 = vld [vmem:[#allocation2 + $0x10] sm:$0xf]
    %v57 = vld [vmem:[#allocation2 + $0x14] sm:$0xf]
    %v58 = vld [vmem:[#allocation2 + $0x18] sm:$0xf]
    %v59 = vld [vmem:[#allocation2 + $0x1c] sm:$0xf]
    %v60 = vld [vmem:[#allocation2 + $0x20] sm:$0xf]
    %v61 = vld [vmem:[#allocation2 + $0x24] sm:$0xf]
    %v62 = vld [vmem:[#allocation2 + $0x28] sm:$0xf]
    %v63 = vld [vmem:[#allocation2 + $0x2c] sm:$0xf]
    %v64 = vld [vmem:[#allocation2 + $0x30] sm:$0xf]
    %v65 = vld [vmem:[#allocation2 + $0x34] sm:$0xf]
    %v66 = vld [vmem:[#allocation2 + $0x38] sm:$0xf]
    %v67 = vld [vmem:[#allocation2 + $0x3c] sm:$0xf]
    %v68 = vld [vmem:[%s2] sm:$0x1]
    %v70 = vlaneseq
    %v71 = vshrl.u32 %v70, 7
    %v72 = vsub.s32 0, %v71
    %v73 = vrot.slane %v68, %v72
    %v91 = vunpack.c.l.b16 %v52
    %v92 = vunpack.c.l.b16 %v53
    %v93 = vunpack.c.l.b16 %v54
    %v94 = vunpack.c.l.b16 %v55
    %v95 = vunpack.c.l.b16 %v56
    %v96 = vunpack.c.l.b16 %v57
    %v97 = vunpack.c.l.b16 %v58
    %v98 = vunpack.c.l.b16 %v59
    %v99 = vunpack.c.l.b16 %v60
    %v100 = vunpack.c.l.b16 %v61
    %v101 = vunpack.c.l.b16 %v62
    %v102 = vunpack.c.l.b16 %v63
    %v103 = vunpack.c.l.b16 %v64
    %v104 = vunpack.c.l.b16 %v65
    %v105 = vunpack.c.l.b16 %v66
    %v106 = vunpack.c.l.b16 %v67
    %v107 = vpack.c.b16 %v92, %v91
    %v108 = vpack.c.b16 %v94, %v93
    %v109 = vpack.c.b16 %v96, %v95
    %v110 = vpack.c.b16 %v98, %v97
    %v111 = vpack.c.b16 %v100, %v99
    %v112 = vpack.c.b16 %v102, %v101
    %v113 = vpack.c.b16 %v104, %v103
    %v114 = vpack.c.b16 %v106, %v105
    %123 = vmatprep.subr.bf16.mxu0 0
    %124 = vmatpush1.bf16.msra.mxu0 %v107
    %125 = vmatprep.subr.bf16.mxu0 0
    %126 = vmatpush1.bf16.msra.mxu0 %v108
    %127 = vmatprep.subr.bf16.mxu0 0
    %128 = vmatpush1.bf16.msra.mxu0 %v109
    %129 = vmatprep.subr.bf16.mxu0 0
    %130 = vmatpush1.bf16.msra.mxu0 %v110
    %131 = vmatprep.subr.bf16.mxu0 0
    %132 = vmatpush1.bf16.msra.mxu0 %v111
    %133 = vmatprep.subr.bf16.mxu0 0
    %134 = vmatpush1.bf16.msra.mxu0 %v112
    %135 = vmatprep.subr.bf16.mxu0 0
    %136 = vmatpush1.bf16.msra.mxu0 %v113
    %137 = vmatprep.subr.bf16.mxu0 0
    %138 = vmatpush1.bf16.msra.mxu0 %v114
    %139 = vmatprep.subr.bf16.mxu0 0
    %140 = vmatpush1.bf16.msra.mxu0 0
    %141 = vmatprep.subr.bf16.mxu0 0
    %142 = vmatpush1.bf16.msra.mxu0 0
    %143 = vmatprep.subr.bf16.mxu0 0
    %144 = vmatpush1.bf16.msra.mxu0 0
    %145 = vmatprep.subr.bf16.mxu0 0
    %146 = vmatpush1.bf16.msra.mxu0 0
    %147 = vmatprep.subr.bf16.mxu0 0
    %148 = vmatpush1.bf16.msra.mxu0 0
    %149 = vmatprep.subr.bf16.mxu0 0
    %150 = vmatpush1.bf16.msra.mxu0 0
    %151 = vmatprep.subr.bf16.mxu0 0
    %152 = vmatpush1.bf16.msra.mxu0 0
    %153 = vmatprep.subr.bf16.mxu0 0
    %154 = vmatpush1.bf16.msra.mxu0 0
    %155 = vmatprep.mubr.bf16.mxu0 0
    %156 = vmatmul.mubr.bf16.gmra.mrb[0].mxu0 %v51
    %v157 = vpop.f32.mrb[0].mxu0
    %v158 = vadd.f32 %v73, %v157
    %v159 = vpop.f32.mrb[0].mxu0
    %v160 = vpop.f32.mrb[0].mxu0
    %v161 = vadd.f32 %v73, %v160
    %v162 = vpop.f32.mrb[0].mxu0
    %163 = vdwg.mxu0
    %v164 = vmax.f32 %v158, 0.0
    %v165 = vmax.f32 %v161, 0.0
    %v166 = vpack.c.bf16 %v165, %v164
    %v167 = vld [vmem:[#allocation4] sm:$0xf]
    %v168 = vld [vmem:[#allocation4 + $0x4] sm:$0xf]
    %v169 = vld [vmem:[#allocation4 + $0x8] sm:$0xf]
    %v170 = vld [vmem:[#allocation4 + $0xc] sm:$0xf]
    %v171 = vld [vmem:[#allocation4 + $0x10] sm:$0xf]
    %v172 = vld [vmem:[#allocation4 + $0x14] sm:$0xf]
    %v173 = vld [vmem:[#allocation4 + $0x18] sm:$0xf]
    %v174 = vld [vmem:[#allocation4 + $0x1c] sm:$0xf]
    %v175 = vld [vmem:[#allocation4 + $0x20] sm:$0xf]
    %v176 = vld [vmem:[#allocation4 + $0x24] sm:$0xf]
    %v177 = vld [vmem:[#allocation4 + $0x28] sm:$0xf]
    %v178 = vld [vmem:[#allocation4 + $0x2c] sm:$0xf]
    %v179 = vld [vmem:[#allocation4 + $0x30] sm:$0xf]
    %v180 = vld [vmem:[#allocation4 + $0x34] sm:$0xf]
    %v181 = vld [vmem:[#allocation4 + $0x38] sm:$0xf]
    %v182 = vld [vmem:[#allocation4 + $0x3c] sm:$0xf]
    %v183 = vld [vmem:[%s4] sm:$0x1]
    %v185 = vlaneseq
    %v186 = vshrl.u32 %v185, 7
    %v187 = vsub.s32 0, %v186
    %v188 = vrot.slane %v183, %v187
    %v206 = vunpack.c.l.b16 %v167
    %v207 = vunpack.c.l.b16 %v168
    %v208 = vunpack.c.l.b16 %v169
    %v209 = vunpack.c.l.b16 %v170
    %v210 = vunpack.c.l.b16 %v171
    %v211 = vunpack.c.l.b16 %v172
    %v212 = vunpack.c.l.b16 %v173
    %v213 = vunpack.c.l.b16 %v174
    %v214 = vunpack.c.l.b16 %v175
    %v215 = vunpack.c.l.b16 %v176
    %v216 = vunpack.c.l.b16 %v177
    %v217 = vunpack.c.l.b16 %v178
    %v218 = vunpack.c.l.b16 %v179
    %v219 = vunpack.c.l.b16 %v180
    %v220 = vunpack.c.l.b16 %v181
    %v221 = vunpack.c.l.b16 %v182
    %v222 = vpack.c.b16 %v207, %v206
    %v223 = vpack.c.b16 %v209, %v208
    %v224 = vpack.c.b16 %v211, %v210
    %v225 = vpack.c.b16 %v213, %v212
    %v226 = vpack.c.b16 %v215, %v214
    %v227 = vpack.c.b16 %v217, %v216
    %v228 = vpack.c.b16 %v219, %v218
    %v229 = vpack.c.b16 %v221, %v220
    %238 = vmatprep.subr.bf16.mxu0 0
    %239 = vmatpush1.bf16.msra.mxu0 %v222
    %240 = vmatprep.subr.bf16.mxu0 0
    %241 = vmatpush1.bf16.msra.mxu0 %v223
    %242 = vmatprep.subr.bf16.mxu0 0
    %243 = vmatpush1.bf16.msra.mxu0 %v224
    %244 = vmatprep.subr.bf16.mxu0 0
    %245 = vmatpush1.bf16.msra.mxu0 %v225
    %246 = vmatprep.subr.bf16.mxu0 0
    %247 = vmatpush1.bf16.msra.mxu0 %v226
    %248 = vmatprep.subr.bf16.mxu0 0
    %249 = vmatpush1.bf16.msra.mxu0 %v227
    %250 = vmatprep.subr.bf16.mxu0 0
    %251 = vmatpush1.bf16.msra.mxu0 %v228
    %252 = vmatprep.subr.bf16.mxu0 0
    %253 = vmatpush1.bf16.msra.mxu0 %v229
    %254 = vmatprep.subr.bf16.mxu0 0
    %255 = vmatpush1.bf16.msra.mxu0 0
    %256 = vmatprep.subr.bf16.mxu0 0
    %257 = vmatpush1.bf16.msra.mxu0 0
    %258 = vmatprep.subr.bf16.mxu0 0
    %259 = vmatpush1.bf16.msra.mxu0 0
    %260 = vmatprep.subr.bf16.mxu0 0
    %261 = vmatpush1.bf16.msra.mxu0 0
    %262 = vmatprep.subr.bf16.mxu0 0
    %263 = vmatpush1.bf16.msra.mxu0 0
    %264 = vmatprep.subr.bf16.mxu0 0
    %265 = vmatpush1.bf16.msra.mxu0 0
    %266 = vmatprep.subr.bf16.mxu0 0
    %267 = vmatpush1.bf16.msra.mxu0 0
    %268 = vmatprep.subr.bf16.mxu0 0
    %269 = vmatpush1.bf16.msra.mxu0 0
    %270 = vmatprep.mubr.bf16.mxu0 0
    %271 = vmatmul.mubr.bf16.gmra.mrb[0].mxu0 %v166
    %v272 = vpop.f32.mrb[0].mxu0
    %v273 = vadd.f32 %v188, %v272
    %v274 = vpop.f32.mrb[0].mxu0
    %v275 = vpop.f32.mrb[0].mxu0
    %v276 = vadd.f32 %v188, %v275
    %v277 = vpop.f32.mrb[0].mxu0
    %278 = vdwg.mxu0
    %279 = vst [vmem:[%s5] sm:$0xff] %v273
    %280 = vst [vmem:[%s5 + $0x8] sm:$0xff] %v276
    // Predicated region
    $region30: #{_ffn_apply.1} parent=1 // pred_check
      _
    $region31: #{_ffn_apply.1} parent=1 // pred_check_branch
      %282 = sbr.rel (0) target = $region33
    $region32: #{_ffn_apply.1} parent=1 // pred_region
      _
    $region33: #{_ffn_apply.1} parent=1 // pred_fallthru
      _
    // Predicated region
    $region34: #{_ffn_apply.1} parent=1 // pred_check
      _
    $region35: #{_ffn_apply.1} parent=1 // pred_check_branch
      %284 = sbr.rel (0) target = $region37
    $region36: #{_ffn_apply.1} parent=1 // pred_region
      _
    $region37: #{_ffn_apply.1} parent=1 // pred_fallthru
      _
    %285 = vsyncpa [#allocation3], 1
    %286 = vsyncpa [#allocation5], 1

</llo_original>
